<compile_context>
chip_gen: v7x
topology: tpu7x:2x2x1
jax: 0.10.0
libtpu: 0.0.40
codegen_flags: <defaults>
</compile_context>

<pallas_src>
import functools

import jax
import jax.numpy as jnp
from jax.experimental import pallas as pl
from jax.experimental.pallas import tpu as pltpu

SMOOTHING = 0.1


def _ls_ce_kernel(logits_ref, target_ref, out_ref, *, smoothing: float,
                  num_classes: int, batch_size: int, tile_rows: int):
    """One batch tile -> one (1, 8, 128) block holding the tile's loss sum."""
    x = logits_ref[...]                                   # (TB, C), native dtype
    tgt = target_ref[...]                                 # (TB, 1), int32

    off = smoothing / (num_classes - 1)
    on = 1.0 - smoothing

    # Row max in native dtype (exact for bf16/f32); remaining math in f32.
    m = jnp.max(x, axis=-1, keepdims=True).astype(jnp.float32)          # (TB,1)
    lse = jnp.log(jnp.sum(jnp.exp(x.astype(jnp.float32) - m),
                          axis=-1, keepdims=True))                      # (TB,1)

    # Fused target-extraction + uniform sweep: sum_j w_j * x_j in one pass.
    cls = jax.lax.broadcasted_iota(jnp.int32, x.shape, 1)
    w = jnp.where(cls == tgt, jnp.float32(on), jnp.float32(off))        # (TB,C)
    weighted = jnp.sum(w * x.astype(jnp.float32), axis=-1, keepdims=True)

    # Since sum_j w_j == 1:  loss_i = -sum_j w_j*(x_j - m - lse) = m + lse - weighted.
    per_ex = (m + lse) - weighted                                        # (TB,1)

    # Mask rows beyond the true batch (ragged last tile reads undefined data;
    # any NaN/Inf there is replaced by 0 before the reduction below).
    row = pl.program_id(0) * tile_rows + jax.lax.broadcasted_iota(
        jnp.int32, per_ex.shape, 0)
    per_ex = jnp.where(row < batch_size, per_ex, 0.0)

    # Tiny lane-dense writeback: the tile's partial sum, broadcast over (8,128).
    out_ref[...] = jnp.broadcast_to(jnp.sum(per_ex), out_ref.shape)


def _pick_batch_tile(b: int, c: int, itemsize: int) -> int:
    """Batch tile sized for the real VMEM working set, rounded to 16 rows.

    Working-set model per tile: 2 double-buffered native-dtype input blocks plus
    ~3 full-tile f32 temporaries (exp / weighted products).  The ~20 MiB budget
    stays well inside v7x's 64 MiB physical VMEM and the 48 MiB scoped limit we
    request, and is far past the bandwidth knee on all chips.
    """
    budget = 20 * 1024 * 1024
    per_row = c * (2 * itemsize + 3 * 4)
    rows = budget // max(1, per_row)
    tb = max(16, min(1024, (rows // 16) * 16))
    # Never allocate a block much bigger than the batch itself.
    tb = min(tb, -(-b // 16) * 16)
    # v7x megacore: prefer at least 2 grid steps when the batch allows it.
    if tb >= b and b > 16:
        half = -(-b // 2)
        tb = max(16, -(-half // 16) * 16)
    return tb


def label_smoothing_cross_entropy(logits: jax.Array, target: jax.Array,
                                  smoothing: float = SMOOTHING) -> jax.Array:
    """logits: (B, C) float (f32/bf16); target: (B,) int.

    Returns scalar float32 mean loss (matches PyTorch LabelSmoothingCrossEntropy).
    """
    b, c = logits.shape
    itemsize = jnp.dtype(logits.dtype).itemsize
    tb = _pick_batch_tile(b, c, itemsize)
    num_tiles = -(-b // tb)

    # No jnp.pad of logits: partial last block is masked in-kernel.
    target2d = target.astype(jnp.int32).reshape(b, 1)

    # TODO(synk): for very large vocabularies (>=100k classes) add a second grid
    # axis over C with an online logsumexp so blocks stay (TB, TC) and the class
    # axis can be split across v7x cores.

    kernel = functools.partial(_ls_ce_kernel, smoothing=float(smoothing),
                               num_classes=c, batch_size=b, tile_rows=tb)

    partials = pl.pallas_call(
        kernel,
        out_shape=jax.ShapeDtypeStruct((num_tiles, 8, 128), jnp.float32),
        grid_spec=pltpu.PrefetchScalarGridSpec(
            num_scalar_prefetch=0,
            grid=(num_tiles,),
            in_specs=[
                pl.BlockSpec((tb, c), lambda i: (i, 0)),   # logits tile
                pl.BlockSpec((tb, 1), lambda i: (i, 0)),   # targets tile
            ],
            out_specs=pl.BlockSpec((1, 8, 128), lambda i: (i, 0, 0)),
        ),
        compiler_params=pltpu.CompilerParams(
            dimension_semantics=("parallel",),             # megacore on v7x
            vmem_limit_bytes=48 * 1024 * 1024,
        ),
        cost_estimate=pl.CostEstimate(
            flops=int(5 * b * c),
            transcendentals=int(b * c + b),
            bytes_accessed=int(b * c * itemsize + b * 4 + num_tiles * 8 * 128 * 4),
        ),
    )(logits, target2d)

    # Sum the per-tile partial sums (num_tiles scalars) and take the mean.
    return jnp.sum(partials[:, 0, 0]) / jnp.float32(b)


if __name__ == "__main__":
    key = jax.random.PRNGKey(0)
    k1, k2, k3, k4, k5, k6 = jax.random.split(key, 6)

    def ref_loss(lg, tg, s=SMOOTHING):
        bb, cc = lg.shape
        logp = jax.nn.log_softmax(lg.astype(jnp.float32), axis=-1)
        td = jnp.full((bb, cc), s / (cc - 1), dtype=jnp.float32)
        td = td.at[jnp.arange(bb), tg].set(1.0 - s)
        return jnp.mean(-jnp.sum(td * logp, axis=-1))

    # Case 1: tiny batch, single tile.
    B, C = 8, 8
    logits = jax.random.normal(k1, (B, C), dtype=jnp.float32)
    target = jax.random.randint(k2, (B,), 0, C, dtype=jnp.int32)
    loss = label_smoothing_cross_entropy(logits, target, SMOOTHING)
    jax.block_until_ready(loss)
    assert jnp.allclose(loss, ref_loss(logits, target), atol=1e-5, rtol=1e-5), (
        loss, ref_loss(logits, target))

    # Case 2: ragged batch (exercises the in-kernel tail-row masking, no pad).
    B2, C2 = 10, 8
    logits2 = jax.random.normal(k3, (B2, C2), dtype=jnp.float32)
    target2 = jax.random.randint(k4, (B2,), 0, C2, dtype=jnp.int32)
    loss2 = label_smoothing_cross_entropy(logits2, target2, SMOOTHING)
    jax.block_until_ready(loss2)
    assert jnp.allclose(loss2, ref_loss(logits2, target2), atol=1e-5, rtol=1e-5), (
        loss2, ref_loss(logits2, target2))

    # Case 3: bf16 logits, odd B and C, multi-tile grid.
    B3, C3 = 37, 33
    logits3 = jax.random.normal(k5, (B3, C3), dtype=jnp.bfloat16)
    target3 = jax.random.randint(k6, (B3,), 0, C3, dtype=jnp.int32)
    loss3 = label_smoothing_cross_entropy(logits3, target3, SMOOTHING)
    jax.block_until_ready(loss3)
    assert jnp.allclose(loss3, ref_loss(logits3, target3), atol=1e-3, rtol=1e-3), (
        loss3, ref_loss(logits3, target3))

    print("KERNEL_OK")
</pallas_src>

<mosaic_0001>
module attributes {stable_mosaic.version = 11 : i64} {
  func.func @_ls_ce_kernel(%arg0: i32, %arg1: memref<16x8xf32, #tpu.memory_space<vmem>>, %arg2: memref<16x1xi32, #tpu.memory_space<vmem>>, %arg3: memref<1x8x128xf32, #tpu.memory_space<vmem>>) attributes {dimension_semantics = [#tpu.dimension_semantics<parallel>], iteration_bounds = array<i64: 1>, scalar_prefetch = 0 : i64, scratch_operands = 0 : i64, tpu.core_type = #tpu.core_type<tc>, window_params = [{transform_indices = @transform_0, window_bounds = array<i64: 16, 8>}, {transform_indices = @transform_1, window_bounds = array<i64: 16, 1>}, {transform_indices = @transform_2, window_bounds = array<i64: 1, 8, 128>}]} {
    %c0 = arith.constant 0 : index
    %c0_0 = arith.constant 0 : index
    %0 = vector.load %arg1[%c0, %c0_0] : memref<16x8xf32, #tpu.memory_space<vmem>>, vector<16x8xf32>
    %c0_1 = arith.constant 0 : index
    %c0_2 = arith.constant 0 : index
    %1 = vector.load %arg2[%c0_1, %c0_2] : memref<16x1xi32, #tpu.memory_space<vmem>>, vector<16x1xi32>
    %cst = arith.constant dense<0xFF800000> : vector<16xf32>
    %2 = vector.multi_reduction <maximumf>, %0, %cst [1] : vector<16x8xf32> to vector<16xf32>
    %3 = vector.shape_cast %2 : vector<16xf32> to vector<16x1xf32>
    %4 = vector.broadcast %3 : vector<16x1xf32> to vector<16x8xf32>
    %5 = arith.subf %0, %4 : vector<16x8xf32>
    %6 = math.exp %5 : vector<16x8xf32>
    %cst_3 = arith.constant dense<0.000000e+00> : vector<16xf32>
    %7 = vector.multi_reduction <add>, %6, %cst_3 [1] : vector<16x8xf32> to vector<16xf32>
    %8 = vector.shape_cast %7 : vector<16xf32> to vector<16x1xf32>
    %9 = math.log %8 : vector<16x1xf32>
    %10 = tpu.iota {dimensions = array<i32: 1>} : vector<16x8xi32>
    %11 = vector.broadcast %1 : vector<16x1xi32> to vector<16x8xi32>
    %12 = arith.cmpi eq, %10, %11 : vector<16x8xi32>
    %cst_4 = arith.constant 0.899999976 : f32
    %cst_5 = arith.constant 0.0142857144 : f32
    %13 = vector.broadcast %cst_4 : f32 to vector<16x8xf32>
    %14 = vector.broadcast %cst_5 : f32 to vector<16x8xf32>
    %15 = arith.select %12, %13, %14 : vector<16x8xi1>, vector<16x8xf32>
    %16 = arith.mulf %15, %0 : vector<16x8xf32>
    %cst_6 = arith.constant dense<0.000000e+00> : vector<16xf32>
    %17 = vector.multi_reduction <add>, %16, %cst_6 [1] : vector<16x8xf32> to vector<16xf32>
    %18 = vector.shape_cast %17 : vector<16xf32> to vector<16x1xf32>
    %19 = arith.addf %3, %9 : vector<16x1xf32>
    %20 = arith.subf %19, %18 : vector<16x1xf32>
    %c16_i32 = arith.constant 16 : i32
    %21 = arith.muli %arg0, %c16_i32 : i32
    %22 = tpu.iota {dimensions = array<i32: 0>} : vector<16x1xi32>
    %23 = vector.broadcast %21 : i32 to vector<16x1xi32>
    %24 = arith.addi %23, %22 : vector<16x1xi32>
    %c8_i32 = arith.constant 8 : i32
    %25 = vector.broadcast %c8_i32 : i32 to vector<16x1xi32>
    %26 = arith.cmpi slt, %24, %25 : vector<16x1xi32>
    %cst_7 = arith.constant 0.000000e+00 : f32
    %27 = vector.broadcast %cst_7 : f32 to vector<16x1xf32>
    %28 = arith.select %26, %20, %27 : vector<16x1xi1>, vector<16x1xf32>
    %29 = vector.shape_cast %28 : vector<16x1xf32> to vector<1x16x1xf32>
    %cst_8 = arith.constant dense<0.000000e+00> : vector<1xf32>
    %30 = vector.multi_reduction <add>, %29, %cst_8 [1, 2] : vector<1x16x1xf32> to vector<1xf32>
    %31 = vector.shape_cast %30 : vector<1xf32> to vector<1x1x1xf32>
    %32 = vector.extract %31[0, 0, 0] : f32 from vector<1x1x1xf32>
    %33 = vector.broadcast %32 : f32 to vector<1x8x128xf32>
    %c0_9 = arith.constant 0 : index
    %c0_10 = arith.constant 0 : index
    %c0_11 = arith.constant 0 : index
    %34 = vector.load %arg3[%c0_9, %c0_10, %c0_11] : memref<1x8x128xf32, #tpu.memory_space<vmem>>, vector<1x8x128xf32>
    tpu.vector_store %arg3[%c0_9, %c0_10, %c0_11], %33 {strides = array<i32>} : memref<1x8x128xf32, #tpu.memory_space<vmem>>, vector<1x8x128xf32>,
    return
  }
  func.func @transform_0(%arg0: i32) -> (i32, i32) {
    %c0_i32 = arith.constant 0 : i32
    %c0_i32_0 = arith.constant 0 : i32
    return %arg0, %c0_i32 : i32, i32
  }
  func.func @transform_1(%arg0: i32) -> (i32, i32) {
    %c0_i32 = arith.constant 0 : i32
    %c0_i32_0 = arith.constant 0 : i32
    return %arg0, %c0_i32 : i32, i32
  }
  func.func @transform_2(%arg0: i32) -> (i32, i32, i32) {
    %c0_i32 = arith.constant 0 : i32
    %c0_i32_0 = arith.constant 0 : i32
    %c0_i32_1 = arith.constant 0 : i32
    return %arg0, %c0_i32, %c0_i32_0 : i32, i32, i32
  }
}

</mosaic_0001>

<llo_original>
// kernel: tpu_custom_call.1
$region0: #{tpu_custom_call.1}
  #allocation0 [shape = 'u32[]', space=smem, size = 0x4, offset = 0x4, fixed_abs, tag = 'smem constant byte address 0x4 - core index']
  #allocation1 [shape = 'u32[144,128]{1,0:T(1,128)}', space=vmem, size = 0x12000, scoped, tag = 'internal scratch']
  %s0 = inlined_call_operand.vmem [shape: f32[8,8], index: 0, kind: input, shape index: {}]
  %s1 = inlined_call_operand.vmem [shape: s32[8,1], index: 1, kind: input, shape index: {}]
  %s2 = inlined_call_operand.hbm [shape: f32[1,8,128], index: 2, kind: output, shape index: {}]
  %s3 = sld [smem:[#allocation0]]
  $region18: #{tpu_custom_call.1} parent=0
    _
  %s5 = ssub.s32 1, %s3
  %s6 = scalar_select 0, %s5, %s3
  $region1: #{tpu_custom_call.1} parent=0
    #allocation2 [shape = 'u8[4096]{0}', space=vmem, size = 0x1000, scoped, tag = 'output window, operand 0, single buffered']
    #allocation3 [shape = 's32[1]{0}', space=sflag, size = 0x4, scoped, tag = 'scoped memory for tpu_custom_call.1']
    %7 = vsyncpa [#allocation3], 0
    // Predicated region
    $region2: #{tpu_custom_call.1} parent=1 // pred_check
      _
    $region3: #{tpu_custom_call.1} parent=1 // pred_check_branch
      %9 = sbr.rel (0) target = $region5
    $region4: #{tpu_custom_call.1} parent=1 // pred_region
      _
    $region5: #{tpu_custom_call.1} parent=1 // pred_fallthru
      _
    // Predicated region
    $region6: #{tpu_custom_call.1} parent=1 // pred_check
      _
    $region7: #{tpu_custom_call.1} parent=1 // pred_check_branch
      %11 = sbr.rel (0) target = $region9
    $region8: #{tpu_custom_call.1} parent=1 // pred_region
      _
    $region9: #{tpu_custom_call.1} parent=1 // pred_fallthru
      _
    %v12 = vld [vmem:[%s0] sm:$0xff]
    %v13 = vld [vmem:[%s0 + $0x8] sm:$0xff]
    %v14 = vld [vmem:[%s1] sm:$0xff]
    %v15 = vld [vmem:[%s1 + $0x8] sm:$0xff]
    %vm16 = vcmask 64512
    %v17 = vsel %vm16, %v12, -inf
    %18 = vmax.xlane.f32.xlu0 %v17
    %v19 = vpop.xlane.xlu0 %18
    %v20 = vsel %vm16, %v13, -inf
    %21 = vmax.xlane.f32.xlu0 %v20
    %v22 = vpop.xlane.xlu0 %21
    %v23 = vsub.f32 %v12, %v19
    %v24 = vsub.f32 %v13, %v22
    %v25 = vmul.f32 %v23, 1.442695
    %v26 = vpow.pop %v25
    %v27 = vmul.f32 %v24, 1.442695
    %v28 = vpow.pop %v27
    %v29 = vsel %vm16, %v26, 0.0
    %30 = vadd.xlane.f32.xlu0 %v29
    %v31 = vpop.xlane.xlu0 %30
    %v32 = vsel %vm16, %v28, 0.0
    %33 = vadd.xlane.f32.xlu0 %v32
    %v34 = vpop.xlane.xlu0 %33
    %v35 = vlog2.pop %v31
    %v36 = vmul.f32 %v35, 0.6931472
    %v37 = vlog2.pop %v34
    %v38 = vmul.f32 %v37, 0.6931472
    %v39 = vlaneseq
    %v40 = vand.u32 %v39, 127
    %41 = vset.pattern.permute.xlu0 0
    %42 = vperm.xlu0 %41, %v14
    %v43 = vpop.permute.xlu0 %42
    %44 = vset.pattern.permute.xlu0 0
    %45 = vperm.xlu0 %44, %v15
    %v46 = vpop.permute.xlu0 %45
    %vm47 = vcmp.eq.s32.totalorder %v40, %v43
    %vm48 = vcmp.eq.s32.totalorder %v40, %v46
    %v49 = vsel %vm47, 0.9, 0.014285714
    %v50 = vsel %vm48, 0.9, 0.014285714
    %v51 = vmul.f32 %v49, %v12
    %v52 = vmul.f32 %v50, %v13
    %v53 = vsel %vm16, %v51, 0.0
    %54 = vadd.xlane.f32.xlu0 %v53
    %v55 = vpop.xlane.xlu0 %54
    %v56 = vsel %vm16, %v52, 0.0
    %57 = vadd.xlane.f32.xlu0 %v56
    %v58 = vpop.xlane.xlu0 %57
    %v59 = vadd.f32 %v19, %v36
    %v60 = vadd.f32 %v22, %v38
    %v61 = vsub.f32 %v59, %v55
    %v62 = vsub.f32 %v60, %v58
    %s63 = smul.u32 0, 16
    %v64 = vlaneseq
    %v65 = vshrl.u32 %v64, 7
    %v66 = vadd.s32 %v65, 8
    %v67 = vstv %s63
    %v68 = vadd.s32 %v67, %v65
    %v69 = vadd.s32 %v67, %v66
    %vm70 = vcmp.lt.s32.totalorder %v68, 8
    %vm71 = vcmp.lt.s32.totalorder %v69, 8
    %v72 = vsel %vm70, %v61, 0.0
    %v73 = vsel %vm71, %v62, 0.0
    %vm74 = vcmask 7168
    %v75 = vsel %vm74, %v72, 0.0
    %v76 = vsel %vm74, %v73, 0.0
    %v77 = vadd.f32 %v75, %v76
    %78 = vadd.xlane.f32.xlu0 %v77
    %v79 = vpop.xlane.xlu0 %78
    %v80 = vrot.slane %v79, 4
    %v81 = vadd.f32 %v79, %v80
    %v82 = vrot.slane %v81, 2
    %v83 = vadd.f32 %v81, %v82
    %v84 = vrot.slane %v83, 1
    %v85 = vadd.f32 %v83, %v84
    %s86 = vtos %v85
    %v87 = vstv %s86
    %88 = vst [vmem:[#allocation2] sm:$0xff] %v87
    // Predicated region
    $region10: #{tpu_custom_call.1} parent=1 // pred_check
      _
    $region11: #{tpu_custom_call.1} parent=1 // pred_check_branch
      %90 = sbr.rel (0) target = $region13
    $region12: #{tpu_custom_call.1} parent=1 // pred_region
      %s92 = ssub.s32 128, 128
      %93 = vsyncadd [#allocation3], %s92
      %s95 = sshll.u32 [#allocation2], 4
      %s96 = int_to_ptr.vmem [resolvable:$true] %s95
      %98 = dma.vmem_to_hbm [thread:$0]  %s96, 128, %s2, [#allocation3]
    $region13: #{tpu_custom_call.1} parent=1 // pred_fallthru
      _
    // Predicated region
    $region14: #{tpu_custom_call.1} parent=1 // pred_check
      _
    $region15: #{tpu_custom_call.1} parent=1 // pred_check_branch
      %100 = sbr.rel (0) target = $region17
    $region16: #{tpu_custom_call.1} parent=1 // pred_region
      %101 = dma.done [#allocation3], 128
    $region17: #{tpu_custom_call.1} parent=1 // pred_fallthru
      _
    %102 = vsyncpa [#allocation3], 1

</llo_original>
